<compile_context>
chip_gen: v7x
topology: tpu7x:2x2x1
jax: 0.10.0
libtpu: 0.0.40
codegen_flags: <defaults>
</compile_context>

<pallas_src>
import jax
import jax.numpy as jnp
from jax.experimental import pallas as pl
from jax.experimental.pallas import tpu as pltpu

BN_EPS = 1e-5
LANE = 128          # TPU lane width: channel dims padded to multiples of 128
DEFAULT_TM = 512    # rows per grid step (double-buffered by the BlockSpec pipeline)
BF16_MIN_K = 256    # contraction-dim threshold above which matmul inputs go bf16


def _round_up(n, m):
    return (n + m - 1) // m * m


# ----------------------------------------------------------------------------
# Fused "whole network" Pallas kernel
# ----------------------------------------------------------------------------

def _make_chain_kernel(num_layers, relu_flags, bf16_flags):
    """Build the fused multi-layer kernel (all params are compile-time)."""
    def kernel(*refs):
        x_ref = refs[0]
        o_ref = refs[-1]
        h = x_ref[...]
        for li in range(num_layers):
            w = refs[1 + 2 * li][...]
            b = refs[2 + 2 * li][...]
            lhs = h.astype(jnp.bfloat16) if bf16_flags[li] else h
            y = jnp.dot(lhs, w, preferred_element_type=jnp.float32) + b
            if relu_flags[li]:
                y = jnp.maximum(y, 0.0)
            h = y
        o_ref[...] = h.astype(o_ref.dtype)
    return kernel


def fused_pointwise_chain(x, layers, tm=DEFAULT_TM):
    """Apply the whole per-point layer chain in one pallas_call.

    x:      (M, Cin_true) float32 flattened activations.
    layers: list of (w_pad, b_pad, relu: bool, bf16: bool) with channel dims
            already zero-padded to multiples of 128.
    Returns the padded (M, Cout_pad) result; caller slices true channels.
    """
    M, cin_true = x.shape
    cin_pad = layers[0][0].shape[0]
    cout_pad = layers[-1][0].shape[1]

    # Lane-dense channel padding.  Zeros propagate as zeros through every layer
    # (padded weight rows/cols and biases are zero, ReLU(0) == 0).
    if cin_pad > cin_true:
        x = jnp.pad(x, ((0, 0), (0, cin_pad - cin_true)))

    # Row tiling: multiple-of-8 sublanes, TM rows per grid step.
    m_pad = _round_up(M, 8)
    tm = min(tm, m_pad)
    m_pad = _round_up(m_pad, tm)
    if m_pad > M:
        x = jnp.pad(x, ((0, m_pad - M), (0, 0)))

    relu_flags = tuple(l[2] for l in layers)
    bf16_flags = tuple(l[3] for l in layers)
    kernel = _make_chain_kernel(len(layers), relu_flags, bf16_flags)

    in_specs = [pl.BlockSpec((tm, cin_pad), lambda i: (i, 0))]
    args = [x]
    for (w, b, _, _) in layers:
        in_specs.append(pl.BlockSpec(w.shape, lambda i: (0, 0)))   # VMEM-resident
        in_specs.append(pl.BlockSpec(b.shape, lambda i: (0, 0)))
        args.append(w)
        args.append(b)

    # VMEM budget: resident weights + double-buffered in/out activation tiles
    # + the widest intermediate.  Only raise the scoped limit when the default
    # (16/32 MiB) would actually be exceeded (large row tiles / 2176-ch stage).
    max_c = max([cin_pad] + [l[0].shape[1] for l in layers])
    est = (sum(w.nbytes + b.nbytes for (w, b, _, _) in layers)
           + 2 * tm * cin_pad * 4 + 2 * tm * cout_pad * 4 + 2 * tm * max_c * 4)
    vmem_limit = None
    if est > 24 * 1024 * 1024:
        vmem_limit = int(min(2 * est, 96 * 1024 * 1024))

    out = pl.pallas_call(
        kernel,
        out_shape=jax.ShapeDtypeStruct((m_pad, cout_pad), x.dtype),
        grid=(m_pad // tm,),
        in_specs=in_specs,
        out_specs=pl.BlockSpec((tm, cout_pad), lambda i: (i, 0)),
        compiler_params=pltpu.CompilerParams(
            dimension_semantics=("parallel",),   # megacore row sharding on v7x
            vmem_limit_bytes=vmem_limit),
    )(*args)
    return out[:M]


# ----------------------------------------------------------------------------
# Deterministic parameter construction (shapes from the module __init__)
# ----------------------------------------------------------------------------

def _linear_params(key, cin, cout):
    kw, kb = jax.random.split(key)
    bound = 1.0 / jnp.sqrt(jnp.float32(cin))
    w = jax.random.uniform(kw, (cin, cout), jnp.float32, -bound, bound)
    b = jax.random.uniform(kb, (cout,), jnp.float32, -bound, bound)
    return w, b


def _bn_params(key, c):
    k1, k2, k3, k4 = jax.random.split(key, 4)
    gamma = 1.0 + 0.1 * jax.random.normal(k1, (c,), jnp.float32)
    beta = 0.1 * jax.random.normal(k2, (c,), jnp.float32)
    mean = 0.1 * jax.random.normal(k3, (c,), jnp.float32)
    var = 1.0 + 0.1 * jax.random.uniform(k4, (c,), jnp.float32)
    return gamma, beta, mean, var


def _fold_and_pad(w, b, bn, relu):
    """Fold eval-mode BN into (W, b) and zero-pad channels to 128-lane multiples."""
    if bn is not None:
        g, beta, mu, var = bn
        scale = g * jax.lax.rsqrt(var + BN_EPS)
        w = w * scale[None, :]
        b = (b - mu) * scale + beta
    cin, cout = w.shape
    cin_p, cout_p = _round_up(cin, LANE), _round_up(cout, LANE)
    w_pad = jnp.zeros((cin_p, cout_p), jnp.float32).at[:cin, :cout].set(w)
    b_pad = jnp.zeros((1, cout_p), jnp.float32).at[0, :cout].set(b)
    use_bf16 = cin >= BF16_MIN_K
    if use_bf16:
        # halves HBM/VMEM bytes for the heavy contraction and feeds the bf16 MXU
        w_pad = w_pad.astype(jnp.bfloat16)
    return (w_pad, b_pad, relu, use_bf16)


# Module-level "former plane" bookkeeping, mirroring the reference globals.
former_inlier_plane = None
former_neighbor_plane = None


class PointTransformerSegPallas:
    def __init__(self, key, blocks, planes, c=13, k=0,
                 inlier_first=False, neighbor_first=False,
                 inlier=False, neighbor=False, last_block=False,
                 tile_rows=DEFAULT_TM):
        self.c = c
        self.k = k
        self.tile_rows = tile_rows
        self.inlier_first = inlier_first
        self.neighbor_first = neighbor_first
        self.inlier, self.neighbor = inlier, neighbor
        self.last_block = last_block
        self.in_planes = c

        keys = jax.random.split(key, len(blocks) + 1)

        # raw_chain: list of (w, b, bn_or_None, relu) in execution order.
        self.raw_chain = []
        for i in range(len(blocks)):
            self._make_enc(keys[i], planes[i], blocks[i])

        if k == 2:
            kh1, kh2, kh3 = jax.random.split(keys[-1], 3)
            hid = planes[0] // 2
            w1, b1 = _linear_params(kh1, planes[-1], hid)
            self.raw_chain.append((w1, b1, _bn_params(kh2, hid), True))
            wc, bc = _linear_params(kh3, hid, k)
            self.raw_chain.append((wc, bc, None, False))     # logits: no ReLU

        self.out_channels = self.raw_chain[-1][0].shape[1]
        # Fold BN + pad channels once, at construction time.
        self.chain = [_fold_and_pad(*layer) for layer in self.raw_chain]

    def _make_enc(self, key, planes, blocks):
        global former_inlier_plane, former_neighbor_plane
        bkeys = jax.random.split(key, max(blocks, 1))
        for bi in range(blocks):
            if self.inlier_first or self.neighbor_first:
                self.in_planes = self.c
                self.inlier_first = False
                self.neighbor_first = False
            else:
                if self.inlier:
                    self.in_planes = former_inlier_plane
                if self.neighbor:
                    self.in_planes = former_neighbor_plane
                if self.last_block:
                    self.in_planes = 2176
                    self.last_block = False
            if self.inlier:
                former_inlier_plane = planes
            if self.neighbor:
                former_neighbor_plane = planes
            kl, kb = jax.random.split(bkeys[bi])
            w, b = _linear_params(kl, self.in_planes, planes)
            bn = _bn_params(kb, planes)
            self.raw_chain.append((w, b, bn, True))

    def __call__(self, pxo):
        # pxo: (B, N, c)
        B, N, _ = pxo.shape
        p = pxo[:, :, :3]                 # coords, threaded through unchanged
        x2 = pxo.reshape(B * N, -1)       # (M, C) flattened hot-path view
        out = fused_pointwise_chain(x2, self.chain, tm=self.tile_rows)
        out = out[:, :self.out_channels]
        if self.k == 2:
            return out.reshape(B, N, self.k)
        return [p, out.reshape(B, N, -1)]


# ----------------------------------------------------------------------------
# Pure-JAX reference (unfolded BN) for a correctness sanity check
# ----------------------------------------------------------------------------

def reference_forward(model, pxo):
    B, N, C = pxo.shape
    x = pxo.reshape(B * N, C).astype(jnp.float32)
    for (w, b, bn, relu) in model.raw_chain:
        y = x @ w + b
        if bn is not None:
            g, beta, mu, var = bn
            y = (y - mu) * jax.lax.rsqrt(var + BN_EPS) * g + beta
        if relu:
            y = jnp.maximum(y, 0.0)
        x = y
    return x


# ----------------------------------------------------------------------------
# Demo
# ----------------------------------------------------------------------------

if __name__ == "__main__":
    key = jax.random.PRNGKey(0)
    kparam, kdata = jax.random.split(key)

    B, N, c = 2, 16, 13            # batch, points, input channels (c=13 default)
    blocks = [1, 1]
    planes = [32, 64]

    model = PointTransformerSegPallas(
        kparam, blocks, planes, c=c, k=2,
        inlier_first=True, inlier=True)   # flags chosen so the in_planes chain is consistent

    pxo = jax.random.normal(kdata, (B, N, c), jnp.float32)
    out = model(pxo)                       # (B, N, 2) classification logits
    jax.block_until_ready(out)
    assert out.shape == (B, N, 2)

    ref = reference_forward(model, pxo).reshape(B, N, 2)
    assert jnp.allclose(out, ref, rtol=2e-2, atol=2e-2), \
        f"max abs err {float(jnp.max(jnp.abs(out - ref)))}"
    print("KERNEL_OK")
</pallas_src>

<mosaic_0001>
module attributes {stable_mosaic.version = 11 : i64} {
  func.func @kernel(%arg0: i32, %arg1: memref<32x128xf32, #tpu.memory_space<vmem>>, %arg2: memref<128x128xf32, #tpu.memory_space<vmem>>, %arg3: memref<1x128xf32, #tpu.memory_space<vmem>>, %arg4: memref<128x128xf32, #tpu.memory_space<vmem>>, %arg5: memref<1x128xf32, #tpu.memory_space<vmem>>, %arg6: memref<128x128xf32, #tpu.memory_space<vmem>>, %arg7: memref<1x128xf32, #tpu.memory_space<vmem>>, %arg8: memref<128x128xf32, #tpu.memory_space<vmem>>, %arg9: memref<1x128xf32, #tpu.memory_space<vmem>>, %arg10: memref<32x128xf32, #tpu.memory_space<vmem>>) attributes {dimension_semantics = [#tpu.dimension_semantics<parallel>], iteration_bounds = array<i64: 1>, scalar_prefetch = 0 : i64, scratch_operands = 0 : i64, tpu.core_type = #tpu.core_type<tc>, window_params = [{transform_indices = @transform_0, window_bounds = array<i64: 32, 128>}, {pipeline_mode = #tpu.pipeline_mode<synchronous>, transform_indices = @transform_1, window_bounds = array<i64: 128, 128>}, {pipeline_mode = #tpu.pipeline_mode<synchronous>, transform_indices = @transform_2, window_bounds = array<i64: 1, 128>}, {pipeline_mode = #tpu.pipeline_mode<synchronous>, transform_indices = @transform_3, window_bounds = array<i64: 128, 128>}, {pipeline_mode = #tpu.pipeline_mode<synchronous>, transform_indices = @transform_4, window_bounds = array<i64: 1, 128>}, {pipeline_mode = #tpu.pipeline_mode<synchronous>, transform_indices = @transform_5, window_bounds = array<i64: 128, 128>}, {pipeline_mode = #tpu.pipeline_mode<synchronous>, transform_indices = @transform_6, window_bounds = array<i64: 1, 128>}, {pipeline_mode = #tpu.pipeline_mode<synchronous>, transform_indices = @transform_7, window_bounds = array<i64: 128, 128>}, {pipeline_mode = #tpu.pipeline_mode<synchronous>, transform_indices = @transform_8, window_bounds = array<i64: 1, 128>}, {transform_indices = @transform_9, window_bounds = array<i64: 32, 128>}]} {
    %c0 = arith.constant 0 : index
    %c0_0 = arith.constant 0 : index
    %0 = vector.load %arg1[%c0, %c0_0] : memref<32x128xf32, #tpu.memory_space<vmem>>, vector<32x128xf32>
    %c0_1 = arith.constant 0 : index
    %c0_2 = arith.constant 0 : index
    %1 = vector.load %arg2[%c0_1, %c0_2] : memref<128x128xf32, #tpu.memory_space<vmem>>, vector<128x128xf32>
    %c0_3 = arith.constant 0 : index
    %c0_4 = arith.constant 0 : index
    %2 = vector.load %arg3[%c0_3, %c0_4] : memref<1x128xf32, #tpu.memory_space<vmem>>, vector<1x128xf32>
    %cst = arith.constant dense<0.000000e+00> : vector<32x128xf32>
    %3 = tpu.matmul %0, %1, %cst {dimension_numbers = #tpu.dot_dimension_numbers<[1], [0], [0], [1], [0, 0, 1, 1], [], []>} : vector<32x128xf32>, vector<128x128xf32>, vector<32x128xf32> -> vector<32x128xf32>
    %4 = vector.broadcast %2 : vector<1x128xf32> to vector<32x128xf32>
    %5 = arith.addf %3, %4 : vector<32x128xf32>
    %cst_5 = arith.constant 0.000000e+00 : f32
    %6 = vector.broadcast %cst_5 : f32 to vector<32x128xf32>
    %7 = arith.maximumf %5, %6 : vector<32x128xf32>
    %c0_6 = arith.constant 0 : index
    %c0_7 = arith.constant 0 : index
    %8 = vector.load %arg4[%c0_6, %c0_7] : memref<128x128xf32, #tpu.memory_space<vmem>>, vector<128x128xf32>
    %c0_8 = arith.constant 0 : index
    %c0_9 = arith.constant 0 : index
    %9 = vector.load %arg5[%c0_8, %c0_9] : memref<1x128xf32, #tpu.memory_space<vmem>>, vector<1x128xf32>
    %cst_10 = arith.constant dense<0.000000e+00> : vector<32x128xf32>
    %10 = tpu.matmul %7, %8, %cst_10 {dimension_numbers = #tpu.dot_dimension_numbers<[1], [0], [0], [1], [0, 0, 1, 1], [], []>} : vector<32x128xf32>, vector<128x128xf32>, vector<32x128xf32> -> vector<32x128xf32>
    %11 = vector.broadcast %9 : vector<1x128xf32> to vector<32x128xf32>
    %12 = arith.addf %10, %11 : vector<32x128xf32>
    %cst_11 = arith.constant 0.000000e+00 : f32
    %13 = vector.broadcast %cst_11 : f32 to vector<32x128xf32>
    %14 = arith.maximumf %12, %13 : vector<32x128xf32>
    %c0_12 = arith.constant 0 : index
    %c0_13 = arith.constant 0 : index
    %15 = vector.load %arg6[%c0_12, %c0_13] : memref<128x128xf32, #tpu.memory_space<vmem>>, vector<128x128xf32>
    %c0_14 = arith.constant 0 : index
    %c0_15 = arith.constant 0 : index
    %16 = vector.load %arg7[%c0_14, %c0_15] : memref<1x128xf32, #tpu.memory_space<vmem>>, vector<1x128xf32>
    %cst_16 = arith.constant dense<0.000000e+00> : vector<32x128xf32>
    %17 = tpu.matmul %14, %15, %cst_16 {dimension_numbers = #tpu.dot_dimension_numbers<[1], [0], [0], [1], [0, 0, 1, 1], [], []>} : vector<32x128xf32>, vector<128x128xf32>, vector<32x128xf32> -> vector<32x128xf32>
    %18 = vector.broadcast %16 : vector<1x128xf32> to vector<32x128xf32>
    %19 = arith.addf %17, %18 : vector<32x128xf32>
    %cst_17 = arith.constant 0.000000e+00 : f32
    %20 = vector.broadcast %cst_17 : f32 to vector<32x128xf32>
    %21 = arith.maximumf %19, %20 : vector<32x128xf32>
    %c0_18 = arith.constant 0 : index
    %c0_19 = arith.constant 0 : index
    %22 = vector.load %arg8[%c0_18, %c0_19] : memref<128x128xf32, #tpu.memory_space<vmem>>, vector<128x128xf32>
    %c0_20 = arith.constant 0 : index
    %c0_21 = arith.constant 0 : index
    %23 = vector.load %arg9[%c0_20, %c0_21] : memref<1x128xf32, #tpu.memory_space<vmem>>, vector<1x128xf32>
    %cst_22 = arith.constant dense<0.000000e+00> : vector<32x128xf32>
    %24 = tpu.matmul %21, %22, %cst_22 {dimension_numbers = #tpu.dot_dimension_numbers<[1], [0], [0], [1], [0, 0, 1, 1], [], []>} : vector<32x128xf32>, vector<128x128xf32>, vector<32x128xf32> -> vector<32x128xf32>
    %25 = vector.broadcast %23 : vector<1x128xf32> to vector<32x128xf32>
    %26 = arith.addf %24, %25 : vector<32x128xf32>
    %c0_23 = arith.constant 0 : index
    %c0_24 = arith.constant 0 : index
    %27 = vector.load %arg10[%c0_23, %c0_24] : memref<32x128xf32, #tpu.memory_space<vmem>>, vector<32x128xf32>
    tpu.vector_store %arg10[%c0_23, %c0_24], %26 {strides = array<i32>} : memref<32x128xf32, #tpu.memory_space<vmem>>, vector<32x128xf32>,
    return
  }
  func.func @transform_0(%arg0: i32) -> (i32, i32) {
    %c0_i32 = arith.constant 0 : i32
    %c0_i32_0 = arith.constant 0 : i32
    return %arg0, %c0_i32 : i32, i32
  }
  func.func @transform_1(%arg0: i32) -> (i32, i32) {
    %c0_i32 = arith.constant 0 : i32
    %c0_i32_0 = arith.constant 0 : i32
    %c0_i32_1 = arith.constant 0 : i32
    return %c0_i32, %c0_i32_0 : i32, i32
  }
  func.func @transform_2(%arg0: i32) -> (i32, i32) {
    %c0_i32 = arith.constant 0 : i32
    %c0_i32_0 = arith.constant 0 : i32
    %c0_i32_1 = arith.constant 0 : i32
    return %c0_i32, %c0_i32_0 : i32, i32
  }
  func.func @transform_3(%arg0: i32) -> (i32, i32) {
    %c0_i32 = arith.constant 0 : i32
    %c0_i32_0 = arith.constant 0 : i32
    %c0_i32_1 = arith.constant 0 : i32
    return %c0_i32, %c0_i32_0 : i32, i32
  }
  func.func @transform_4(%arg0: i32) -> (i32, i32) {
    %c0_i32 = arith.constant 0 : i32
    %c0_i32_0 = arith.constant 0 : i32
    %c0_i32_1 = arith.constant 0 : i32
    return %c0_i32, %c0_i32_0 : i32, i32
  }
  func.func @transform_5(%arg0: i32) -> (i32, i32) {
    %c0_i32 = arith.constant 0 : i32
    %c0_i32_0 = arith.constant 0 : i32
    %c0_i32_1 = arith.constant 0 : i32
    return %c0_i32, %c0_i32_0 : i32, i32
  }
  func.func @transform_6(%arg0: i32) -> (i32, i32) {
    %c0_i32 = arith.constant 0 : i32
    %c0_i32_0 = arith.constant 0 : i32
    %c0_i32_1 = arith.constant 0 : i32
    return %c0_i32, %c0_i32_0 : i32, i32
  }
  func.func @transform_7(%arg0: i32) -> (i32, i32) {
    %c0_i32 = arith.constant 0 : i32
    %c0_i32_0 = arith.constant 0 : i32
    %c0_i32_1 = arith.constant 0 : i32
    return %c0_i32, %c0_i32_0 : i32, i32
  }
  func.func @transform_8(%arg0: i32) -> (i32, i32) {
    %c0_i32 = arith.constant 0 : i32
    %c0_i32_0 = arith.constant 0 : i32
    %c0_i32_1 = arith.constant 0 : i32
    return %c0_i32, %c0_i32_0 : i32, i32
  }
  func.func @transform_9(%arg0: i32) -> (i32, i32) {
    %c0_i32 = arith.constant 0 : i32
    %c0_i32_0 = arith.constant 0 : i32
    return %arg0, %c0_i32 : i32, i32
  }
}

</mosaic_0001>

<llo_original>
// kernel: tpu_custom_call.1
$region0: #{tpu_custom_call.1}
  #allocation0 [shape = 'u32[]', space=smem, size = 0x4, offset = 0x4, fixed_abs, tag = 'smem constant byte address 0x4 - core index']
  #allocation1 [shape = 'u32[144,128]{1,0:T(1,128)}', space=vmem, size = 0x12000, scoped, tag = 'internal scratch']
  %s0 = inlined_call_operand.hbm [shape: f32[32,128], index: 0, kind: input, shape index: {}]
  %s1 = inlined_call_operand.hbm [shape: f32[128,128], index: 1, kind: input, shape index: {}]
  %s2 = inlined_call_operand.vmem [shape: f32[1,128], index: 2, kind: input, shape index: {}]
  %s3 = inlined_call_operand.hbm [shape: f32[128,128], index: 3, kind: input, shape index: {}]
  %s4 = inlined_call_operand.vmem [shape: f32[1,128], index: 4, kind: input, shape index: {}]
  %s5 = inlined_call_operand.hbm [shape: f32[128,128], index: 5, kind: input, shape index: {}]
  %s6 = inlined_call_operand.vmem [shape: f32[1,128], index: 6, kind: input, shape index: {}]
  %s7 = inlined_call_operand.hbm [shape: f32[128,128], index: 7, kind: input, shape index: {}]
  %s8 = inlined_call_operand.vmem [shape: f32[1,128], index: 8, kind: input, shape index: {}]
  %s9 = inlined_call_operand.hbm [shape: f32[32,128], index: 9, kind: output, shape index: {}]
  %s10 = sld [smem:[#allocation0]]
  $region66: #{tpu_custom_call.1} parent=0
    _
  %s12 = ssub.s32 1, %s10
  %s13 = scalar_select 0, %s12, %s10
  $region1: #{tpu_custom_call.1} parent=0
    #allocation2 [shape = 'u8[16384]{0}', space=vmem, size = 0x4000, scoped, tag = 'input window, operand 0, single buffered']
    #allocation3 [shape = 's32[1]{0}', space=sflag, size = 0x4, scoped, tag = 'scoped memory for tpu_custom_call.1']
    #allocation4 [shape = 's32[1]{0}', space=sflag, size = 0x4, scoped, tag = 'scoped memory for tpu_custom_call.1']
    #allocation5 [shape = 'u8[65536]{0}', space=vmem, size = 0x10000, scoped, tag = 'input window, operand 1, single buffered']
    #allocation6 [shape = 's32[1]{0}', space=sflag, size = 0x4, scoped, tag = 'scoped memory for tpu_custom_call.1']
    #allocation7 [shape = 'u8[65536]{0}', space=vmem, size = 0x10000, scoped, tag = 'input window, operand 3, single buffered']
    #allocation8 [shape = 'u8[65536]{0}', space=vmem, size = 0x10000, scoped, tag = 'input window, operand 5, single buffered']
    #allocation9 [shape = 's32[1]{0}', space=sflag, size = 0x4, scoped, tag = 'scoped memory for tpu_custom_call.1']
    #allocation10 [shape = 'u8[65536]{0}', space=vmem, size = 0x10000, scoped, tag = 'input window, operand 7, single buffered']
    #allocation11 [shape = 'u8[16384]{0}', space=vmem, size = 0x4000, scoped, tag = 'output window, operand 0, single buffered']
    %14 = vsyncpa [#allocation3], 0
    %15 = vsyncpa [#allocation6], 0
    %16 = vsyncpa [#allocation9], 0
    %17 = vsyncpa [#allocation4], 0
    // Predicated region
    $region2: #{tpu_custom_call.1} parent=1 // pred_check
      _
    $region3: #{tpu_custom_call.1} parent=1 // pred_check_branch
      %19 = sbr.rel (0) target = $region5
    $region4: #{tpu_custom_call.1} parent=1 // pred_region
      %s21 = ssub.s32 512, 512
      %22 = vsyncadd [#allocation3], %s21
      %s23 = sshll.u32 [#allocation2], 4
      %s24 = int_to_ptr.vmem [resolvable:$true] %s23
      %29 = dma.hbm_to_vmem [thread:$0]  %s0, 512, %s24, [#allocation3], 128, 128, 8
    $region5: #{tpu_custom_call.1} parent=1 // pred_fallthru
      _
    // Predicated region
    $region6: #{tpu_custom_call.1} parent=1 // pred_check
      _
    $region7: #{tpu_custom_call.1} parent=1 // pred_check_branch
      %31 = sbr.rel (0) target = $region9
    $region8: #{tpu_custom_call.1} parent=1 // pred_region
      %s33 = ssub.s32 2048, 2048
      %34 = vsyncadd [#allocation6], %s33
      %s35 = sshll.u32 [#allocation5], 4
      %s36 = int_to_ptr.vmem [resolvable:$true] %s35
      %41 = dma.hbm_to_vmem [thread:$0]  %s1, 2048, %s36, [#allocation6], 128, 128, 8
    $region9: #{tpu_custom_call.1} parent=1 // pred_fallthru
      _
    // Predicated region
    $region10: #{tpu_custom_call.1} parent=1 // pred_check
      _
    $region11: #{tpu_custom_call.1} parent=1 // pred_check_branch
      %43 = sbr.rel (0) target = $region13
    $region12: #{tpu_custom_call.1} parent=1 // pred_region
      _
    $region13: #{tpu_custom_call.1} parent=1 // pred_fallthru
      _
    // Predicated region
    $region14: #{tpu_custom_call.1} parent=1 // pred_check
      _
    $region15: #{tpu_custom_call.1} parent=1 // pred_check_branch
      %45 = sbr.rel (0) target = $region17
    $region16: #{tpu_custom_call.1} parent=1 // pred_region
      %s47 = ssub.s32 2048, 2048
      %48 = vsyncadd [#allocation6], %s47
      %s49 = sshll.u32 [#allocation7], 4
      %s50 = int_to_ptr.vmem [resolvable:$true] %s49
      %55 = dma.hbm_to_vmem [thread:$0]  %s3, 2048, %s50, [#allocation6], 128, 128, 8
    $region17: #{tpu_custom_call.1} parent=1 // pred_fallthru
      _
    // Predicated region
    $region18: #{tpu_custom_call.1} parent=1 // pred_check
      _
    $region19: #{tpu_custom_call.1} parent=1 // pred_check_branch
      %57 = sbr.rel (0) target = $region21
    $region20: #{tpu_custom_call.1} parent=1 // pred_region
      _
    $region21: #{tpu_custom_call.1} parent=1 // pred_fallthru
      _
    // Predicated region
    $region22: #{tpu_custom_call.1} parent=1 // pred_check
      _
    $region23: #{tpu_custom_call.1} parent=1 // pred_check_branch
      %59 = sbr.rel (0) target = $region25
    $region24: #{tpu_custom_call.1} parent=1 // pred_region
      %s61 = ssub.s32 2048, 2048
      %62 = vsyncadd [#allocation9], %s61
      %s63 = sshll.u32 [#allocation8], 4
      %s64 = int_to_ptr.vmem [resolvable:$true] %s63
      %69 = dma.hbm_to_vmem [thread:$0]  %s5, 2048, %s64, [#allocation9], 128, 128, 8
    $region25: #{tpu_custom_call.1} parent=1 // pred_fallthru
      _
    // Predicated region
    $region26: #{tpu_custom_call.1} parent=1 // pred_check
      _
    $region27: #{tpu_custom_call.1} parent=1 // pred_check_branch
      %71 = sbr.rel (0) target = $region29
    $region28: #{tpu_custom_call.1} parent=1 // pred_region
      _
    $region29: #{tpu_custom_call.1} parent=1 // pred_fallthru
      _
    // Predicated region
    $region30: #{tpu_custom_call.1} parent=1 // pred_check
      _
    $region31: #{tpu_custom_call.1} parent=1 // pred_check_branch
      %73 = sbr.rel (0) target = $region33
    $region32: #{tpu_custom_call.1} parent=1 // pred_region
      %s75 = ssub.s32 2048, 2048
      %76 = vsyncadd [#allocation9], %s75
      %s77 = sshll.u32 [#allocation10], 4
      %s78 = int_to_ptr.vmem [resolvable:$true] %s77
      %83 = dma.hbm_to_vmem [thread:$0]  %s7, 2048, %s78, [#allocation9], 128, 128, 8
    $region33: #{tpu_custom_call.1} parent=1 // pred_fallthru
      _
    // Predicated region
    $region34: #{tpu_custom_call.1} parent=1 // pred_check
      _
    $region35: #{tpu_custom_call.1} parent=1 // pred_check_branch
      %85 = sbr.rel (0) target = $region37
    $region36: #{tpu_custom_call.1} parent=1 // pred_region
      _
    $region37: #{tpu_custom_call.1} parent=1 // pred_fallthru
      _
    // Predicated region
    $region38: #{tpu_custom_call.1} parent=1 // pred_check
      _
    $region39: #{tpu_custom_call.1} parent=1 // pred_check_branch
      %87 = sbr.rel (0) target = $region41
    $region40: #{tpu_custom_call.1} parent=1 // pred_region
      %88 = dma.done [#allocation3], 512
    $region41: #{tpu_custom_call.1} parent=1 // pred_fallthru
      _
    // Predicated region
    $region42: #{tpu_custom_call.1} parent=1 // pred_check
      _
    $region43: #{tpu_custom_call.1} parent=1 // pred_check_branch
      %90 = sbr.rel (0) target = $region45
    $region44: #{tpu_custom_call.1} parent=1 // pred_region
      %91 = dma.done [#allocation6], 2048
    $region45: #{tpu_custom_call.1} parent=1 // pred_fallthru
      _
    // Predicated region
    $region46: #{tpu_custom_call.1} parent=1 // pred_check
      _
    $region47: #{tpu_custom_call.1} parent=1 // pred_check_branch
      %93 = sbr.rel (0) target = $region49
    $region48: #{tpu_custom_call.1} parent=1 // pred_region
      %94 = dma.done [#allocation6], 2048
    $region49: #{tpu_custom_call.1} parent=1 // pred_fallthru
      _
    // Predicated region
    $region50: #{tpu_custom_call.1} parent=1 // pred_check
      _
    $region51: #{tpu_custom_call.1} parent=1 // pred_check_branch
      %96 = sbr.rel (0) target = $region53
    $region52: #{tpu_custom_call.1} parent=1 // pred_region
      %97 = dma.done [#allocation9], 2048
    $region53: #{tpu_custom_call.1} parent=1 // pred_fallthru
      _
    // Predicated region
    $region54: #{tpu_custom_call.1} parent=1 // pred_check
      _
    $region55: #{tpu_custom_call.1} parent=1 // pred_check_branch
      %99 = sbr.rel (0) target = $region57
    $region56: #{tpu_custom_call.1} parent=1 // pred_region
      %100 = dma.done [#allocation9], 2048
    $region57: #{tpu_custom_call.1} parent=1 // pred_fallthru
      _
    %v101 = vld [vmem:[#allocation2] sm:$0xff]
    %v102 = vld [vmem:[#allocation2 + $0x8] sm:$0xff]
    %v103 = vld [vmem:[#allocation2 + $0x10] sm:$0xff]
    %v104 = vld [vmem:[#allocation2 + $0x18] sm:$0xff]
    %v105 = vld [vmem:[#allocation5] sm:$0xff]
    %v106 = vld [vmem:[#allocation5 + $0x8] sm:$0xff]
    %v107 = vld [vmem:[#allocation5 + $0x10] sm:$0xff]
    %v108 = vld [vmem:[#allocation5 + $0x18] sm:$0xff]
    %v109 = vld [vmem:[#allocation5 + $0x20] sm:$0xff]
    %v110 = vld [vmem:[#allocation5 + $0x28] sm:$0xff]
    %v111 = vld [vmem:[#allocation5 + $0x30] sm:$0xff]
    %v112 = vld [vmem:[#allocation5 + $0x38] sm:$0xff]
    %v113 = vld [vmem:[#allocation5 + $0x40] sm:$0xff]
    %v114 = vld [vmem:[#allocation5 + $0x48] sm:$0xff]
    %v115 = vld [vmem:[#allocation5 + $0x50] sm:$0xff]
    %v116 = vld [vmem:[#allocation5 + $0x58] sm:$0xff]
    %v117 = vld [vmem:[#allocation5 + $0x60] sm:$0xff]
    %v118 = vld [vmem:[#allocation5 + $0x68] sm:$0xff]
    %v119 = vld [vmem:[#allocation5 + $0x70] sm:$0xff]
    %v120 = vld [vmem:[#allocation5 + $0x78] sm:$0xff]
    %v121 = vld [vmem:[%s2] sm:$0x1]
    %v123 = vlaneseq
    %v124 = vshrl.u32 %v123, 7
    %v125 = vsub.s32 0, %v124
    %v126 = vrot.slane %v121, %v125
    %128 = vmatprep.subr.mxu0 0.0
    %129 = vmatpush1.msra.mxu0 %v105
    %130 = vmatprep.subr.mxu0 0.0
    %131 = vmatpush1.msra.mxu0 %v106
    %132 = vmatprep.subr.mxu0 0.0
    %133 = vmatpush1.msra.mxu0 %v107
    %134 = vmatprep.subr.mxu0 0.0
    %135 = vmatpush1.msra.mxu0 %v108
    %136 = vmatprep.subr.mxu0 0.0
    %137 = vmatpush1.msra.mxu0 %v109
    %138 = vmatprep.subr.mxu0 0.0
    %139 = vmatpush1.msra.mxu0 %v110
    %140 = vmatprep.subr.mxu0 0.0
    %141 = vmatpush1.msra.mxu0 %v111
    %142 = vmatprep.subr.mxu0 0.0
    %143 = vmatpush1.msra.mxu0 %v112
    %144 = vmatprep.subr.mxu0 0.0
    %145 = vmatpush1.msra.mxu0 %v113
    %146 = vmatprep.subr.mxu0 0.0
    %147 = vmatpush1.msra.mxu0 %v114
    %148 = vmatprep.subr.mxu0 0.0
    %149 = vmatpush1.msra.mxu0 %v115
    %150 = vmatprep.subr.mxu0 0.0
    %151 = vmatpush1.msra.mxu0 %v116
    %152 = vmatprep.subr.mxu0 0.0
    %153 = vmatpush1.msra.mxu0 %v117
    %154 = vmatprep.subr.mxu0 0.0
    %155 = vmatpush1.msra.mxu0 %v118
    %156 = vmatprep.subr.mxu0 0.0
    %157 = vmatpush1.msra.mxu0 %v119
    %158 = vmatprep.subr.mxu0 0.0
    %159 = vmatpush1.msra.mxu0 %v120
    %160 = vmatprep.subr.mxu0 0.0
    %161 = vmatpush1.msra.mxu0 0.0
    %162 = vmatprep.subr.mxu0 0.0
    %163 = vmatpush1.msra.mxu0 0.0
    %164 = vmatprep.subr.mxu0 0.0
    %165 = vmatpush1.msra.mxu0 0.0
    %166 = vmatprep.subr.mxu0 0.0
    %167 = vmatpush1.msra.mxu0 0.0
    %168 = vmatprep.subr.mxu0 0.0
    %169 = vmatpush1.msra.mxu0 0.0
    %170 = vmatprep.subr.mxu0 0.0
    %171 = vmatpush1.msra.mxu0 0.0
    %172 = vmatprep.subr.mxu0 0.0
    %173 = vmatpush1.msra.mxu0 0.0
    %174 = vmatprep.subr.mxu0 0.0
    %175 = vmatpush1.msra.mxu0 0.0
    %176 = vmatprep.subr.mxu0 0.0
    %177 = vmatpush1.msra.mxu0 0.0
    %178 = vmatprep.subr.mxu0 0.0
    %179 = vmatpush1.msra.mxu0 0.0
    %180 = vmatprep.subr.mxu0 0.0
    %181 = vmatpush1.msra.mxu0 0.0
    %182 = vmatprep.subr.mxu0 0.0
    %183 = vmatpush1.msra.mxu0 0.0
    %184 = vmatprep.subr.mxu0 0.0
    %185 = vmatpush1.msra.mxu0 0.0
    %186 = vmatprep.subr.mxu0 0.0
    %187 = vmatpush1.msra.mxu0 0.0
    %188 = vmatprep.subr.mxu0 0.0
    %189 = vmatpush1.msra.mxu0 0.0
    %190 = vmatprep.subr.mxu0 0.0
    %191 = vmatpush1.msra.mxu0 0.0
    %192 = vmatprep.mubr.f32.mxu0 0.0
    %193 = vmatmul.mubr.f32.gmra.mrb[0].mxu0 %v101
    %v194 = vpop.f32.mrb[0].mxu0
    %v195 = vadd.f32 %v126, %v194
    %v196 = vpop.f32.mrb[0].mxu0
    %197 = vmatprep.mubr.f32.mxu0 0.0
    %198 = vmatmul.mubr.f32.gmra.mrb[0].mxu0 %v102
    %v199 = vpop.f32.mrb[0].mxu0
    %v200 = vadd.f32 %v126, %v199
    %v201 = vpop.f32.mrb[0].mxu0
    %202 = vmatprep.mubr.f32.mxu0 0.0
    %203 = vmatmul.mubr.f32.gmra.mrb[0].mxu0 %v103
    %v204 = vpop.f32.mrb[0].mxu0
    %v205 = vadd.f32 %v126, %v204
    %v206 = vpop.f32.mrb[0].mxu0
    %207 = vmatprep.mubr.f32.mxu0 0.0
    %208 = vmatmul.mubr.f32.gmra.mrb[0].mxu0 %v104
    %v209 = vpop.f32.mrb[0].mxu0
    %v210 = vadd.f32 %v126, %v209
    %v211 = vpop.f32.mrb[0].mxu0
    %212 = vdwg.mxu0
    %v213 = vmax.f32 %v195, 0.0
    %v214 = vmax.f32 %v200, 0.0
    %v215 = vmax.f32 %v205, 0.0
    %v216 = vmax.f32 %v210, 0.0
    %v217 = vld [vmem:[#allocation7] sm:$0xff]
    %v218 = vld [vmem:[#allocation7 + $0x8] sm:$0xff]
    %v219 = vld [vmem:[#allocation7 + $0x10] sm:$0xff]
    %v220 = vld [vmem:[#allocation7 + $0x18] sm:$0xff]
    %v221 = vld [vmem:[#allocation7 + $0x20] sm:$0xff]
    %v222 = vld [vmem:[#allocation7 + $0x28] sm:$0xff]
    %v223 = vld [vmem:[#allocation7 + $0x30] sm:$0xff]
    %v224 = vld [vmem:[#allocation7 + $0x38] sm:$0xff]
    %v225 = vld [vmem:[#allocation7 + $0x40] sm:$0xff]
    %v226 = vld [vmem:[#allocation7 + $0x48] sm:$0xff]
    %v227 = vld [vmem:[#allocation7 + $0x50] sm:$0xff]
    %v228 = vld [vmem:[#allocation7 + $0x58] sm:$0xff]
    %v229 = vld [vmem:[#allocation7 + $0x60] sm:$0xff]
    %v230 = vld [vmem:[#allocation7 + $0x68] sm:$0xff]
    %v231 = vld [vmem:[#allocation7 + $0x70] sm:$0xff]
    %v232 = vld [vmem:[#allocation7 + $0x78] sm:$0xff]
    %v233 = vld [vmem:[%s4] sm:$0x1]
    %v235 = vlaneseq
    %v236 = vshrl.u32 %v235, 7
    %v237 = vsub.s32 0, %v236
    %v238 = vrot.slane %v233, %v237
    %240 = vmatprep.subr.mxu0 0.0
    %241 = vmatpush1.msra.mxu0 %v217
    %242 = vmatprep.subr.mxu0 0.0
    %243 = vmatpush1.msra.mxu0 %v218
    %244 = vmatprep.subr.mxu0 0.0
    %245 = vmatpush1.msra.mxu0 %v219
    %246 = vmatprep.subr.mxu0 0.0
    %247 = vmatpush1.msra.mxu0 %v220
    %248 = vmatprep.subr.mxu0 0.0
    %249 = vmatpush1.msra.mxu0 %v221
    %250 = vmatprep.subr.mxu0 0.0
    %251 = vmatpush1.msra.mxu0 %v222
    %252 = vmatprep.subr.mxu0 0.0
    %253 = vmatpush1.msra.mxu0 %v223
    %254 = vmatprep.subr.mxu0 0.0
    %255 = vmatpush1.msra.mxu0 %v224
    %256 = vmatprep.subr.mxu0 0.0
    %257 = vmatpush1.msra.mxu0 %v225
    %258 = vmatprep.subr.mxu0 0.0
    %259 = vmatpush1.msra.mxu0 %v226
    %260 = vmatprep.subr.mxu0 0.0
    %261 = vmatpush1.msra.mxu0 %v227
    %262 = vmatprep.subr.mxu0 0.0
    %263 = vmatpush1.msra.mxu0 %v228
    %264 = vmatprep.subr.mxu0 0.0
    %265 = vmatpush1.msra.mxu0 %v229
    %266 = vmatprep.subr.mxu0 0.0
    %267 = vmatpush1.msra.mxu0 %v230
    %268 = vmatprep.subr.mxu0 0.0
    %269 = vmatpush1.msra.mxu0 %v231
    %270 = vmatprep.subr.mxu0 0.0
    %271 = vmatpush1.msra.mxu0 %v232
    %272 = vmatprep.subr.mxu0 0.0
    %273 = vmatpush1.msra.mxu0 0.0
    %274 = vmatprep.subr.mxu0 0.0
    %275 = vmatpush1.msra.mxu0 0.0
    %276 = vmatprep.subr.mxu0 0.0
    %277 = vmatpush1.msra.mxu0 0.0
    %278 = vmatprep.subr.mxu0 0.0
    %279 = vmatpush1.msra.mxu0 0.0
    %280 = vmatprep.subr.mxu0 0.0
    %281 = vmatpush1.msra.mxu0 0.0
    %282 = vmatprep.subr.mxu0 0.0
    %283 = vmatpush1.msra.mxu0 0.0
    %284 = vmatprep.subr.mxu0 0.0
    %285 = vmatpush1.msra.mxu0 0.0
    %286 = vmatprep.subr.mxu0 0.0
    %287 = vmatpush1.msra.mxu0 0.0
    %288 = vmatprep.subr.mxu0 0.0
    %289 = vmatpush1.msra.mxu0 0.0
    %290 = vmatprep.subr.mxu0 0.0
    %291 = vmatpush1.msra.mxu0 0.0
    %292 = vmatprep.subr.mxu0 0.0
    %293 = vmatpush1.msra.mxu0 0.0
    %294 = vmatprep.subr.mxu0 0.0
    %295 = vmatpush1.msra.mxu0 0.0
    %296 = vmatprep.subr.mxu0 0.0
    %297 = vmatpush1.msra.mxu0 0.0
    %298 = vmatprep.subr.mxu0 0.0
    %299 = vmatpush1.msra.mxu0 0.0
    %300 = vmatprep.subr.mxu0 0.0
    %301 = vmatpush1.msra.mxu0 0.0
    %302 = vmatprep.subr.mxu0 0.0
    %303 = vmatpush1.msra.mxu0 0.0
    %304 = vmatprep.mubr.f32.mxu0 0.0
    %305 = vmatmul.mubr.f32.gmra.mrb[0].mxu0 %v213
    %v306 = vpop.f32.mrb[0].mxu0
    %v307 = vadd.f32 %v238, %v306
    %v308 = vpop.f32.mrb[0].mxu0
    %309 = vmatprep.mubr.f32.mxu0 0.0
    %310 = vmatmul.mubr.f32.gmra.mrb[0].mxu0 %v214
    %v311 = vpop.f32.mrb[0].mxu0
    %v312 = vadd.f32 %v238, %v311
    %v313 = vpop.f32.mrb[0].mxu0
    %314 = vmatprep.mubr.f32.mxu0 0.0
    %315 = vmatmul.mubr.f32.gmra.mrb[0].mxu0 %v215
    %v316 = vpop.f32.mrb[0].mxu0
    %v317 = vadd.f32 %v238, %v316
    %v318 = vpop.f32.mrb[0].mxu0
    %319 = vmatprep.mubr.f32.mxu0 0.0
    %320 = vmatmul.mubr.f32.gmra.mrb[0].mxu0 %v216
    %v321 = vpop.f32.mrb[0].mxu0
    %v322 = vadd.f32 %v238, %v321
    %v323 = vpop.f32.mrb[0].mxu0
    %324 = vdwg.mxu0
    %v325 = vmax.f32 %v307, 0.0
    %v326 = vmax.f32 %v312, 0.0
    %v327 = vmax.f32 %v317, 0.0
    %v328 = vmax.f32 %v322, 0.0
    %v329 = vld [vmem:[#allocation8] sm:$0xff]
    %v330 = vld [vmem:[#allocation8 + $0x8] sm:$0xff]
    %v331 = vld [vmem:[#allocation8 + $0x10] sm:$0xff]
    %v332 = vld [vmem:[#allocation8 + $0x18] sm:$0xff]
    %v333 = vld [vmem:[#allocation8 + $0x20] sm:$0xff]
    %v334 = vld [vmem:[#allocation8 + $0x28] sm:$0xff]
    %v335 = vld [vmem:[#allocation8 + $0x30] sm:$0xff]
    %v336 = vld [vmem:[#allocation8 + $0x38] sm:$0xff]
    %v337 = vld [vmem:[#allocation8 + $0x40] sm:$0xff]
    %v338 = vld [vmem:[#allocation8 + $0x48] sm:$0xff]
    %v339 = vld [vmem:[#allocation8 + $0x50] sm:$0xff]
    %v340 = vld [vmem:[#allocation8 + $0x58] sm:$0xff]
    %v341 = vld [vmem:[#allocation8 + $0x60] sm:$0xff]
    %v342 = vld [vmem:[#allocation8 + $0x68] sm:$0xff]
    %v343 = vld [vmem:[#allocation8 + $0x70] sm:$0xff]
    %v344 = vld [vmem:[#allocation8 + $0x78] sm:$0xff]
    %v345 = vld [vmem:[%s6] sm:$0x1]
    %v347 = vlaneseq
    %v348 = vshrl.u32 %v347, 7
    %v349 = vsub.s32 0, %v348
    %v350 = vrot.slane %v345, %v349
    %352 = vmatprep.subr.mxu0 0.0
    %353 = vmatpush1.msra.mxu0 %v329
    %354 = vmatprep.subr.mxu0 0.0
    %355 = vmatpush1.msra.mxu0 %v330
    %356 = vmatprep.subr.mxu0 0.0
    %357 = vmatpush1.msra.mxu0 %v331
    %358 = vmatprep.subr.mxu0 0.0
    %359 = vmatpush1.msra.mxu0 %v332
    %360 = vmatprep.subr.mxu0 0.0
    %361 = vmatpush1.msra.mxu0 %v333
    %362 = vmatprep.subr.mxu0 0.0
    %363 = vmatpush1.msra.mxu0 %v334
    %364 = vmatprep.subr.mxu0 0.0
    %365 = vmatpush1.msra.mxu0 %v335
    %366 = vmatprep.subr.mxu0 0.0
    %367 = vmatpush1.msra.mxu0 %v336
    %368 = vmatprep.subr.mxu0 0.0
    %369 = vmatpush1.msra.mxu0 %v337
    %370 = vmatprep.subr.mxu0 0.0
    %371 = vmatpush1.msra.mxu0 %v338
    %372 = vmatprep.subr.mxu0 0.0
    %373 = vmatpush1.msra.mxu0 %v339
    %374 = vmatprep.subr.mxu0 0.0
    %375 = vmatpush1.msra.mxu0 %v340
    %376 = vmatprep.subr.mxu0 0.0
    %377 = vmatpush1.msra.mxu0 %v341
    %378 = vmatprep.subr.mxu0 0.0
    %379 = vmatpush1.msra.mxu0 %v342
    %380 = vmatprep.subr.mxu0 0.0
    %381 = vmatpush1.msra.mxu0 %v343
    %382 = vmatprep.subr.mxu0 0.0
    %383 = vmatpush1.msra.mxu0 %v344
    %384 = vmatprep.subr.mxu0 0.0
    %385 = vmatpush1.msra.mxu0 0.0
    %386 = vmatprep.subr.mxu0 0.0
    %387 = vmatpush1.msra.mxu0 0.0
    %388 = vmatprep.subr.mxu0 0.0
    %389 = vmatpush1.msra.mxu0 0.0
    %390 = vmatprep.subr.mxu0 0.0
    %391 = vmatpush1.msra.mxu0 0.0
    %392 = vmatprep.subr.mxu0 0.0
    %393 = vmatpush1.msra.mxu0 0.0
    %394 = vmatprep.subr.mxu0 0.0
    %395 = vmatpush1.msra.mxu0 0.0
    %396 = vmatprep.subr.mxu0 0.0
    %397 = vmatpush1.msra.mxu0 0.0
    %398 = vmatprep.subr.mxu0 0.0
    %399 = vmatpush1.msra.mxu0 0.0
    %400 = vmatprep.subr.mxu0 0.0
    %401 = vmatpush1.msra.mxu0 0.0
    %402 = vmatprep.subr.mxu0 0.0
    %403 = vmatpush1.msra.mxu0 0.0
    %404 = vmatprep.subr.mxu0 0.0
    %405 = vmatpush1.msra.mxu0 0.0
    %406 = vmatprep.subr.mxu0 0.0
    %407 = vmatpush1.msra.mxu0 0.0
    %408 = vmatprep.subr.mxu0 0.0
    %409 = vmatpush1.msra.mxu0 0.0
    %410 = vmatprep.subr.mxu0 0.0
    %411 = vmatpush1.msra.mxu0 0.0
    %412 = vmatprep.subr.mxu0 0.0
    %413 = vmatpush1.msra.mxu0 0.0
    %414 = vmatprep.subr.mxu0 0.0
    %415 = vmatpush1.msra.mxu0 0.0
    %416 = vmatprep.mubr.f32.mxu0 0.0
    %417 = vmatmul.mubr.f32.gmra.mrb[0].mxu0 %v325
    %v418 = vpop.f32.mrb[0].mxu0
    %v419 = vadd.f32 %v350, %v418
    %v420 = vpop.f32.mrb[0].mxu0
    %421 = vmatprep.mubr.f32.mxu0 0.0
    %422 = vmatmul.mubr.f32.gmra.mrb[0].mxu0 %v326
    %v423 = vpop.f32.mrb[0].mxu0
    %v424 = vadd.f32 %v350, %v423
    %v425 = vpop.f32.mrb[0].mxu0
    %426 = vmatprep.mubr.f32.mxu0 0.0
    %427 = vmatmul.mubr.f32.gmra.mrb[0].mxu0 %v327
    %v428 = vpop.f32.mrb[0].mxu0
    %v429 = vadd.f32 %v350, %v428
    %v430 = vpop.f32.mrb[0].mxu0
    %431 = vmatprep.mubr.f32.mxu0 0.0
    %432 = vmatmul.mubr.f32.gmra.mrb[0].mxu0 %v328
    %v433 = vpop.f32.mrb[0].mxu0
    %v434 = vadd.f32 %v350, %v433
    %v435 = vpop.f32.mrb[0].mxu0
    %436 = vdwg.mxu0
    %v437 = vmax.f32 %v419, 0.0
    %v438 = vmax.f32 %v424, 0.0
    %v439 = vmax.f32 %v429, 0.0
    %v440 = vmax.f32 %v434, 0.0
    %v441 = vld [vmem:[#allocation10] sm:$0xff]
    %v442 = vld [vmem:[#allocation10 + $0x8] sm:$0xff]
    %v443 = vld [vmem:[#allocation10 + $0x10] sm:$0xff]
    %v444 = vld [vmem:[#allocation10 + $0x18] sm:$0xff]
    %v445 = vld [vmem:[#allocation10 + $0x20] sm:$0xff]
    %v446 = vld [vmem:[#allocation10 + $0x28] sm:$0xff]
    %v447 = vld [vmem:[#allocation10 + $0x30] sm:$0xff]
    %v448 = vld [vmem:[#allocation10 + $0x38] sm:$0xff]
    %v449 = vld [vmem:[#allocation10 + $0x40] sm:$0xff]
    %v450 = vld [vmem:[#allocation10 + $0x48] sm:$0xff]
    %v451 = vld [vmem:[#allocation10 + $0x50] sm:$0xff]
    %v452 = vld [vmem:[#allocation10 + $0x58] sm:$0xff]
    %v453 = vld [vmem:[#allocation10 + $0x60] sm:$0xff]
    %v454 = vld [vmem:[#allocation10 + $0x68] sm:$0xff]
    %v455 = vld [vmem:[#allocation10 + $0x70] sm:$0xff]
    %v456 = vld [vmem:[#allocation10 + $0x78] sm:$0xff]
    %v457 = vld [vmem:[%s8] sm:$0x1]
    %v459 = vlaneseq
    %v460 = vshrl.u32 %v459, 7
    %v461 = vsub.s32 0, %v460
    %v462 = vrot.slane %v457, %v461
    %464 = vmatprep.subr.mxu0 0.0
    %465 = vmatpush1.msra.mxu0 %v441
    %466 = vmatprep.subr.mxu0 0.0
    %467 = vmatpush1.msra.mxu0 %v442
    %468 = vmatprep.subr.mxu0 0.0
    %469 = vmatpush1.msra.mxu0 %v443
    %470 = vmatprep.subr.mxu0 0.0
    %471 = vmatpush1.msra.mxu0 %v444
    %472 = vmatprep.subr.mxu0 0.0
    %473 = vmatpush1.msra.mxu0 %v445
    %474 = vmatprep.subr.mxu0 0.0
    %475 = vmatpush1.msra.mxu0 %v446
    %476 = vmatprep.subr.mxu0 0.0
    %477 = vmatpush1.msra.mxu0 %v447
    %478 = vmatprep.subr.mxu0 0.0
    %479 = vmatpush1.msra.mxu0 %v448
    %480 = vmatprep.subr.mxu0 0.0
    %481 = vmatpush1.msra.mxu0 %v449
    %482 = vmatprep.subr.mxu0 0.0
    %483 = vmatpush1.msra.mxu0 %v450
    %484 = vmatprep.subr.mxu0 0.0
    %485 = vmatpush1.msra.mxu0 %v451
    %486 = vmatprep.subr.mxu0 0.0
    %487 = vmatpush1.msra.mxu0 %v452
    %488 = vmatprep.subr.mxu0 0.0
    %489 = vmatpush1.msra.mxu0 %v453
    %490 = vmatprep.subr.mxu0 0.0
    %491 = vmatpush1.msra.mxu0 %v454
    %492 = vmatprep.subr.mxu0 0.0
    %493 = vmatpush1.msra.mxu0 %v455
    %494 = vmatprep.subr.mxu0 0.0
    %495 = vmatpush1.msra.mxu0 %v456
    %496 = vmatprep.subr.mxu0 0.0
    %497 = vmatpush1.msra.mxu0 0.0
    %498 = vmatprep.subr.mxu0 0.0
    %499 = vmatpush1.msra.mxu0 0.0
    %500 = vmatprep.subr.mxu0 0.0
    %501 = vmatpush1.msra.mxu0 0.0
    %502 = vmatprep.subr.mxu0 0.0
    %503 = vmatpush1.msra.mxu0 0.0
    %504 = vmatprep.subr.mxu0 0.0
    %505 = vmatpush1.msra.mxu0 0.0
    %506 = vmatprep.subr.mxu0 0.0
    %507 = vmatpush1.msra.mxu0 0.0
    %508 = vmatprep.subr.mxu0 0.0
    %509 = vmatpush1.msra.mxu0 0.0
    %510 = vmatprep.subr.mxu0 0.0
    %511 = vmatpush1.msra.mxu0 0.0
    %512 = vmatprep.subr.mxu0 0.0
    %513 = vmatpush1.msra.mxu0 0.0
    %514 = vmatprep.subr.mxu0 0.0
    %515 = vmatpush1.msra.mxu0 0.0
    %516 = vmatprep.subr.mxu0 0.0
    %517 = vmatpush1.msra.mxu0 0.0
    %518 = vmatprep.subr.mxu0 0.0
    %519 = vmatpush1.msra.mxu0 0.0
    %520 = vmatprep.subr.mxu0 0.0
    %521 = vmatpush1.msra.mxu0 0.0
    %522 = vmatprep.subr.mxu0 0.0
    %523 = vmatpush1.msra.mxu0 0.0
    %524 = vmatprep.subr.mxu0 0.0
    %525 = vmatpush1.msra.mxu0 0.0
    %526 = vmatprep.subr.mxu0 0.0
    %527 = vmatpush1.msra.mxu0 0.0
    %528 = vmatprep.mubr.f32.mxu0 0.0
    %529 = vmatmul.mubr.f32.gmra.mrb[0].mxu0 %v437
    %v530 = vpop.f32.mrb[0].mxu0
    %v531 = vadd.f32 %v462, %v530
    %v532 = vpop.f32.mrb[0].mxu0
    %533 = vmatprep.mubr.f32.mxu0 0.0
    %534 = vmatmul.mubr.f32.gmra.mrb[0].mxu0 %v438
    %v535 = vpop.f32.mrb[0].mxu0
    %v536 = vadd.f32 %v462, %v535
    %v537 = vpop.f32.mrb[0].mxu0
    %538 = vmatprep.mubr.f32.mxu0 0.0
    %539 = vmatmul.mubr.f32.gmra.mrb[0].mxu0 %v439
    %v540 = vpop.f32.mrb[0].mxu0
    %v541 = vadd.f32 %v462, %v540
    %v542 = vpop.f32.mrb[0].mxu0
    %543 = vmatprep.mubr.f32.mxu0 0.0
    %544 = vmatmul.mubr.f32.gmra.mrb[0].mxu0 %v440
    %v545 = vpop.f32.mrb[0].mxu0
    %v546 = vadd.f32 %v462, %v545
    %v547 = vpop.f32.mrb[0].mxu0
    %548 = vdwg.mxu0
    %549 = vst [vmem:[#allocation11] sm:$0xff] %v531
    %550 = vst [vmem:[#allocation11 + $0x8] sm:$0xff] %v536
    %551 = vst [vmem:[#allocation11 + $0x10] sm:$0xff] %v541
    %552 = vst [vmem:[#allocation11 + $0x18] sm:$0xff] %v546
    // Predicated region
    $region58: #{tpu_custom_call.1} parent=1 // pred_check
      _
    $region59: #{tpu_custom_call.1} parent=1 // pred_check_branch
      %554 = sbr.rel (0) target = $region61
    $region60: #{tpu_custom_call.1} parent=1 // pred_region
      %s556 = ssub.s32 512, 512
      %557 = vsyncadd [#allocation4], %s556
      %s558 = sshll.u32 [#allocation11], 4
      %s559 = int_to_ptr.vmem [resolvable:$true] %s558
      %564 = dma.vmem_to_hbm [thread:$0]  %s559, 512, %s9, [#allocation4], 128, 128, 8
    $region61: #{tpu_custom_call.1} parent=1 // pred_fallthru
      _
    // Predicated region
    $region62: #{tpu_custom_call.1} parent=1 // pred_check
      _
    $region63: #{tpu_custom_call.1} parent=1 // pred_check_branch
      %566 = sbr.rel (0) target = $region65
    $region64: #{tpu_custom_call.1} parent=1 // pred_region
      %567 = dma.done [#allocation4], 512
    $region65: #{tpu_custom_call.1} parent=1 // pred_fallthru
      _
    %568 = vsyncpa [#allocation3], 1
    %569 = vsyncpa [#allocation6], 1
    %570 = vsyncpa [#allocation9], 1
    %571 = vsyncpa [#allocation4], 1

</llo_original>
